<compile_context>
chip_gen: v6e
topology: v6e:2x2x1
jax: 0.10.0
libtpu: 0.0.40
codegen_flags: <defaults>
</compile_context>

<pallas_src>
import functools

import jax
import jax.numpy as jnp
from jax import lax
from jax.experimental import pallas as pl
from jax.experimental.pallas import tpu as pltpu


# ----------------------------------------------------------------------------
# Path 1: tables resident in VMEM, gather via one-hot MXU matmul.
# ----------------------------------------------------------------------------
def gmf_vmem_kernel(uid_ref, iid_ref, uemb_ref, iemb_ref, out_ref):
    # uid_ref / iid_ref : VMEM int32 [tb, 1]   (current batch tile of ids)
    # uemb_ref          : VMEM [user_num, D]   (whole table, resident)
    # iemb_ref          : VMEM [item_num, D]   (whole table, resident)
    # out_ref           : VMEM [tb, D]
    tb = out_ref.shape[0]
    u_rows = uemb_ref.shape[0]
    i_rows = iemb_ref.shape[0]

    uid = uid_ref[...]                                   # (tb, 1) int32
    iid = iid_ref[...]

    # One-hot row selectors; out-of-range ids (should not occur for valid
    # inputs) produce an all-zero row instead of an error like nn.Embedding.
    u_iota = lax.broadcasted_iota(jnp.int32, (tb, u_rows), 1)
    i_iota = lax.broadcasted_iota(jnp.int32, (tb, i_rows), 1)
    one_hot_u = (uid == u_iota).astype(uemb_ref.dtype)
    one_hot_i = (iid == i_iota).astype(iemb_ref.dtype)

    gu = jnp.dot(one_hot_u, uemb_ref[...], preferred_element_type=jnp.float32)
    gi = jnp.dot(one_hot_i, iemb_ref[...], preferred_element_type=jnp.float32)

    out_ref[...] = (gu * gi).astype(out_ref.dtype)


# ----------------------------------------------------------------------------
# Path 2: tables in HBM, per-row DMA gather, double-buffered across grid steps.
# ----------------------------------------------------------------------------
def gmf_hbm_kernel(uid_ref, iid_ref, uemb_hbm, iemb_hbm, out_ref,
                   ubuf, ibuf, sem):
    # uid_ref, iid_ref : SMEM int32 [B]          (scalar prefetch)
    # uemb_hbm         : HBM  [user_num, D]      (memory_space=pl.ANY)
    # iemb_hbm         : HBM  [item_num, D]      (memory_space=pl.ANY)
    # out_ref          : VMEM [tb, D]            (current batch tile)
    # ubuf, ibuf       : VMEM [2, tb, D]         (double-buffered gather bufs)
    # sem              : DMA semaphores, shape (2, 2) = (table, slot)
    t = pl.program_id(0)
    nt = pl.num_programs(0)
    tb = out_ref.shape[0]
    B = uid_ref.shape[0]
    u_rows = uemb_hbm.shape[0]
    i_rows = iemb_hbm.shape[0]

    def issue_tile(tile, slot):
        base = tile * tb

        def body(r, carry):
            idx = jnp.minimum(base + r, B - 1)           # ragged last tile
            u = uid_ref[idx]
            i = iid_ref[idx]
            # Defensive clamp: DMA row gathers are not bounds-checked.
            u = jnp.minimum(jnp.maximum(u, 0), u_rows - 1)
            i = jnp.minimum(jnp.maximum(i, 0), i_rows - 1)
            pltpu.make_async_copy(uemb_hbm.at[pl.ds(u, 1)],
                                  ubuf.at[slot, pl.ds(r, 1)],
                                  sem.at[0, slot]).start()
            pltpu.make_async_copy(iemb_hbm.at[pl.ds(i, 1)],
                                  ibuf.at[slot, pl.ds(r, 1)],
                                  sem.at[1, slot]).start()
            return carry

        # Partially-unrolled issue loop: keeps the descriptor issue rate up
        # without fully inlining 2*tb descriptor sequences at large tb.
        lax.fori_loop(0, tb, body, 0, unroll=8)

    slot = lax.rem(t, 2)

    # Grid axis is "arbitrary" (sequential), so t == 0 really is the first
    # step: prime slot 0 with the first tile's gathers.
    @pl.when(t == 0)
    def _():
        issue_tile(0, 0)

    # Prefetch the NEXT tile into the other slot before waiting on this one,
    # so its HBM gather latency hides behind this tile's wait + compute.
    @pl.when(t + 1 < nt)
    def _():
        issue_tile(t + 1, 1 - slot)

    # ONE aggregate wait per table: the DMA semaphore counts bytes, so a
    # single (tb, D)-sized wait matches the tb row-copy completions issued
    # into this slot (tb * D * itemsize bytes on each side).
    pltpu.make_async_copy(ubuf.at[slot], ubuf.at[slot], sem.at[0, slot]).wait()
    pltpu.make_async_copy(ibuf.at[slot], ibuf.at[slot], sem.at[1, slot]).wait()

    # Single full-block multiply + unmasked lane-dense store.
    out_ref[...] = (ubuf[slot] * ibuf[slot]).astype(out_ref.dtype)


# ----------------------------------------------------------------------------
# Wrapper
# ----------------------------------------------------------------------------
def _round_up(x, m):
    return ((x + m - 1) // m) * m


def _pick_tile(batch, requested):
    # Multiple-of-8 rows (sublane-aligned blocks) and, when the batch allows
    # it, at least 2 grid tiles so v7x's two TensorCores both get work / the
    # HBM path's cross-step prefetch has something to overlap.
    tb = min(requested, _round_up(max(pl.cdiv(batch, 2), 1), 8))
    return max(8, tb)


def gmf_forward(user_id, item_id, user_emb, item_emb, *, tb=None,
                use_vmem_tables=None,
                vmem_table_budget_bytes=4 * 1024 * 1024):
    """GMF forward: user_emb[user_id] * item_emb[item_id], shape (B, D)."""
    B = int(user_id.shape[0])
    U, D = user_emb.shape
    I, D2 = item_emb.shape
    assert D == D2, "user/item embedding dims must match for elementwise *"

    user_id = user_id.astype(jnp.int32)
    item_id = item_id.astype(jnp.int32)
    out_dtype = user_emb.dtype

    if use_vmem_tables is None:
        table_bytes = (user_emb.size + item_emb.size) * user_emb.dtype.itemsize
        use_vmem_tables = table_bytes <= vmem_table_budget_bytes

    if tb is None:
        tb = 256 if use_vmem_tables else 512
    tb = _pick_tile(B, tb)
    n_tiles = pl.cdiv(B, tb)

    if use_vmem_tables:
        # ---- Path 1: whole tables resident in VMEM, one-hot MXU gather. ----
        uid2d = user_id.reshape(B, 1)
        iid2d = item_id.reshape(B, 1)
        return pl.pallas_call(
            gmf_vmem_kernel,
            out_shape=jax.ShapeDtypeStruct((B, D), out_dtype),
            grid=(n_tiles,),
            in_specs=[
                pl.BlockSpec((tb, 1), lambda t: (t, 0)),
                pl.BlockSpec((tb, 1), lambda t: (t, 0)),
                pl.BlockSpec((U, D), lambda t: (0, 0)),   # resident table
                pl.BlockSpec((I, D), lambda t: (0, 0)),   # resident table
            ],
            out_specs=pl.BlockSpec((tb, D), lambda t: (t, 0)),
            compiler_params=pltpu.CompilerParams(
                dimension_semantics=("parallel",),        # v7x: 2 TCs split tiles
                vmem_limit_bytes=32 * 1024 * 1024,        # raise v5e's 16 MiB default
            ),
        )(uid2d, iid2d, user_emb, item_emb)

    # ---- Path 2: HBM-resident tables, double-buffered row-gather DMAs. ----
    # TODO(synk): a 2-D (core, tile) grid would let v7x's two TensorCores split
    # this path too; kept 1-D "arbitrary" because the cross-step double buffer
    # relies on sequential grid execution.
    grid_spec = pltpu.PrefetchScalarGridSpec(
        num_scalar_prefetch=2,                  # user_id, item_id -> SMEM
        grid=(n_tiles,),
        in_specs=[
            pl.BlockSpec(memory_space=pl.ANY),  # user table stays in HBM
            pl.BlockSpec(memory_space=pl.ANY),  # item table stays in HBM
        ],
        out_specs=pl.BlockSpec((tb, D), lambda t, uid, iid: (t, 0)),
        scratch_shapes=[
            pltpu.VMEM((2, tb, D), user_emb.dtype),
            pltpu.VMEM((2, tb, D), item_emb.dtype),
            pltpu.SemaphoreType.DMA((2, 2)),
        ],
    )
    return pl.pallas_call(
        gmf_hbm_kernel,
        out_shape=jax.ShapeDtypeStruct((B, D), out_dtype),
        grid_spec=grid_spec,
        compiler_params=pltpu.CompilerParams(
            dimension_semantics=("arbitrary",),           # sequential: cross-step state
            vmem_limit_bytes=32 * 1024 * 1024,
        ),
    )(user_id, item_id, user_emb, item_emb)


if __name__ == "__main__":
    # Small, deterministic synthetic configuration.
    user_num, item_num = 64, 96
    u_vector_size = i_vector_size = 128   # D (lane-aligned)
    batch = 30                            # not a multiple of tb -> ragged tile

    key = jax.random.PRNGKey(0)
    k_u, k_i, k_uid, k_iid = jax.random.split(key, 4)

    # Deterministic "nn.Embedding" weights (synthetic init, not a checkpoint).
    mf_user_emb = (jax.random.normal(k_u, (user_num, u_vector_size),
                                     dtype=jnp.float32) * 0.01)
    mf_item_emb = (jax.random.normal(k_i, (item_num, i_vector_size),
                                     dtype=jnp.float32) * 0.01)

    user_id = jax.random.randint(k_uid, (batch,), 0, user_num, dtype=jnp.int32)
    item_id = jax.random.randint(k_iid, (batch,), 0, item_num, dtype=jnp.int32)

    # Pure-JAX reference.
    ref = mf_user_emb[user_id] * mf_item_emb[item_id]

    # Path 1 (auto-selected: tables are tiny -> VMEM-resident one-hot gather).
    out_vmem = jax.block_until_ready(
        gmf_forward(user_id, item_id, mf_user_emb, mf_item_emb))
    assert out_vmem.shape == (batch, u_vector_size)
    assert out_vmem.dtype == jnp.float32
    assert jnp.allclose(out_vmem, ref, atol=1e-6, rtol=1e-6)

    # Path 2 (force the HBM double-buffered row-gather path used for large
    # tables) -- same semantics, exercises the DMA/semaphore machinery.
    out_hbm = jax.block_until_ready(
        gmf_forward(user_id, item_id, mf_user_emb, mf_item_emb,
                    use_vmem_tables=False))
    assert out_hbm.shape == (batch, u_vector_size)
    assert jnp.allclose(out_hbm, ref, atol=1e-6, rtol=1e-6)

    print("KERNEL_OK")
</pallas_src>

<mosaic_0001>
module attributes {stable_mosaic.version = 11 : i64} {
  func.func @gmf_vmem_kernel(%arg0: i32, %arg1: memref<16x1xi32, #tpu.memory_space<vmem>>, %arg2: memref<16x1xi32, #tpu.memory_space<vmem>>, %arg3: memref<64x128xf32, #tpu.memory_space<vmem>>, %arg4: memref<96x128xf32, #tpu.memory_space<vmem>>, %arg5: memref<16x128xf32, #tpu.memory_space<vmem>>) attributes {dimension_semantics = [#tpu.dimension_semantics<parallel>], iteration_bounds = array<i64: 2>, scalar_prefetch = 0 : i64, scratch_operands = 0 : i64, tpu.core_type = #tpu.core_type<tc>, window_params = [{transform_indices = @transform_0, window_bounds = array<i64: 16, 1>}, {transform_indices = @transform_1, window_bounds = array<i64: 16, 1>}, {pipeline_mode = #tpu.pipeline_mode<synchronous>, transform_indices = @transform_2, window_bounds = array<i64: 64, 128>}, {pipeline_mode = #tpu.pipeline_mode<synchronous>, transform_indices = @transform_3, window_bounds = array<i64: 96, 128>}, {transform_indices = @transform_4, window_bounds = array<i64: 16, 128>}]} {
    %c0 = arith.constant 0 : index
    %c0_0 = arith.constant 0 : index
    %0 = vector.load %arg1[%c0, %c0_0] : memref<16x1xi32, #tpu.memory_space<vmem>>, vector<16x1xi32>
    %c0_1 = arith.constant 0 : index
    %c0_2 = arith.constant 0 : index
    %1 = vector.load %arg2[%c0_1, %c0_2] : memref<16x1xi32, #tpu.memory_space<vmem>>, vector<16x1xi32>
    %2 = tpu.iota {dimensions = array<i32: 1>} : vector<16x64xi32>
    %3 = tpu.iota {dimensions = array<i32: 1>} : vector<16x96xi32>
    %4 = vector.broadcast %0 : vector<16x1xi32> to vector<16x64xi32>
    %5 = arith.cmpi eq, %4, %2 : vector<16x64xi32>
    %6 = arith.extui %5 : vector<16x64xi1> to vector<16x64xi32>
    %7 = arith.sitofp %6 : vector<16x64xi32> to vector<16x64xf32>
    %8 = vector.broadcast %1 : vector<16x1xi32> to vector<16x96xi32>
    %9 = arith.cmpi eq, %8, %3 : vector<16x96xi32>
    %10 = arith.extui %9 : vector<16x96xi1> to vector<16x96xi32>
    %11 = arith.sitofp %10 : vector<16x96xi32> to vector<16x96xf32>
    %c0_3 = arith.constant 0 : index
    %c0_4 = arith.constant 0 : index
    %12 = vector.load %arg3[%c0_3, %c0_4] : memref<64x128xf32, #tpu.memory_space<vmem>>, vector<64x128xf32>
    %cst = arith.constant dense<0.000000e+00> : vector<16x128xf32>
    %13 = tpu.matmul %7, %12, %cst {dimension_numbers = #tpu.dot_dimension_numbers<[1], [0], [0], [1], [0, 0, 1, 1], [], []>} : vector<16x64xf32>, vector<64x128xf32>, vector<16x128xf32> -> vector<16x128xf32>
    %c0_5 = arith.constant 0 : index
    %c0_6 = arith.constant 0 : index
    %14 = vector.load %arg4[%c0_5, %c0_6] : memref<96x128xf32, #tpu.memory_space<vmem>>, vector<96x128xf32>
    %cst_7 = arith.constant dense<0.000000e+00> : vector<16x128xf32>
    %15 = tpu.matmul %11, %14, %cst_7 {dimension_numbers = #tpu.dot_dimension_numbers<[1], [0], [0], [1], [0, 0, 1, 1], [], []>} : vector<16x96xf32>, vector<96x128xf32>, vector<16x128xf32> -> vector<16x128xf32>
    %16 = arith.mulf %13, %15 : vector<16x128xf32>
    %c0_8 = arith.constant 0 : index
    %c0_9 = arith.constant 0 : index
    %17 = vector.load %arg5[%c0_8, %c0_9] : memref<16x128xf32, #tpu.memory_space<vmem>>, vector<16x128xf32>
    tpu.vector_store %arg5[%c0_8, %c0_9], %16 {strides = array<i32>} : memref<16x128xf32, #tpu.memory_space<vmem>>, vector<16x128xf32>,
    return
  }
  func.func @transform_0(%arg0: i32) -> (i32, i32) {
    %c0_i32 = arith.constant 0 : i32
    %c0_i32_0 = arith.constant 0 : i32
    return %arg0, %c0_i32 : i32, i32
  }
  func.func @transform_1(%arg0: i32) -> (i32, i32) {
    %c0_i32 = arith.constant 0 : i32
    %c0_i32_0 = arith.constant 0 : i32
    return %arg0, %c0_i32 : i32, i32
  }
  func.func @transform_2(%arg0: i32) -> (i32, i32) {
    %c0_i32 = arith.constant 0 : i32
    %c0_i32_0 = arith.constant 0 : i32
    %c0_i32_1 = arith.constant 0 : i32
    return %c0_i32, %c0_i32_0 : i32, i32
  }
  func.func @transform_3(%arg0: i32) -> (i32, i32) {
    %c0_i32 = arith.constant 0 : i32
    %c0_i32_0 = arith.constant 0 : i32
    %c0_i32_1 = arith.constant 0 : i32
    return %c0_i32, %c0_i32_0 : i32, i32
  }
  func.func @transform_4(%arg0: i32) -> (i32, i32) {
    %c0_i32 = arith.constant 0 : i32
    %c0_i32_0 = arith.constant 0 : i32
    return %arg0, %c0_i32 : i32, i32
  }
}

</mosaic_0001>

<llo_original>
// kernel: tpu_custom_call.1
$region0: #{tpu_custom_call.1}
  #allocation0 [shape = 'u32[]', space=smem, size = 0x4, offset = 0x4, fixed_abs, tag = 'smem constant byte address 0x4 - core index']
  #allocation1 [shape = 'u32[144,128]{1,0:T(1,128)}', space=vmem, size = 0x12000, scoped, tag = 'internal scratch']
  %s0 = inlined_call_operand.vmem [shape: s32[30,1], index: 0, kind: input, shape index: {}]
  %s1 = inlined_call_operand.vmem [shape: s32[30,1], index: 1, kind: input, shape index: {}]
  %s2 = inlined_call_operand.vmem [shape: f32[64,128], index: 2, kind: input, shape index: {}]
  %s3 = inlined_call_operand.hbm [shape: f32[96,128], index: 3, kind: input, shape index: {}]
  %s4 = inlined_call_operand.hbm [shape: f32[30,128], index: 4, kind: output, shape index: {}]
  %s5 = sld [smem:[#allocation0]]
  $region53: #{tpu_custom_call.1} parent=0
    _
  %s7 = ssub.s32 1, %s5
  %s8 = scalar_select 0, %s7, %s5
  $region1: #{tpu_custom_call.1} parent=0
    #allocation2 [shape = 'u8[49152]{0}', space=vmem, size = 0xc000, scoped, tag = 'input window, operand 3, single buffered']
    #allocation3 [shape = 's32[2]{0}', space=sflag, size = 0x8, scoped, tag = 'scoped memory for tpu_custom_call.1']
    #allocation4 [shape = 's32[2]{0}', space=sflag, size = 0x8, scoped, tag = 'scoped memory for tpu_custom_call.1']
    #allocation5 [shape = 'u8[16384]{0}', space=vmem, size = 0x4000, scoped, tag = 'output window, operand 0']
    %9 = vsyncpa [#allocation3], 0
    %10 = vsyncpa [#allocation4], 0
    %s11 = scalar_lea.sflag [#allocation4], 1
    %12 = vsyncpa %s11, 0
    loop: start=0, step=1, limit=4
    $region2: #{tpu_custom_call.1} parent=1 // loop_pre_header
      _
    $region3: #{tpu_custom_call.1} parent=1 // loop_header
      %s14 = sphi 0, %s18
      %p15 = scmp.ge.s32.totalorder %s14, 4
      %s24 = sphi 0, %s26
      %s27 = sphi 0, %s24
      %s28 = sphi 0, %s27
      %s44 = sphi 0, %s28
      %s50 = sphi 0, %s52
      %s53 = sphi 0, %s50
      %s54 = sphi 0, %s53
      %s70 = sphi 0, %s54
      %s74 = sphi 0, %s74
      %s76 = sphi 0, %s74
      %s77 = sphi 0, %s76
      %s91 = sphi 0, %s77
      %s95 = sphi 0, %s95
      %s97 = sphi 0, %s95
      %s98 = sphi 0, %s97
      %s112 = sphi 0, %s98
      %s118 = sphi 0, %s120
      %s121 = sphi 0, %s118
      %s122 = sphi 0, %s121
      %s138 = sphi 0, %s122
    $region4: #{tpu_custom_call.1} parent=1 // loop_header_branch
      %17 = sbr.rel (%p15) target = $region8
    $region5: #{tpu_custom_call.1} parent=1 // loop_body
      %s19 = ssub.s32 %s14, 1
      %s20 = ssub.s32 %s14, 2
      %s21 = sadd.s32 %s14, 1
      %s22 = ssub.s32 %s14, %s21
      %p23 = scmp.eq.s32.totalorder %s22, 0
      %s25 = sadd.s32 %s24, 1
      %s26 = scalar_select %p23, %s24, %s25
      %p29 = pneg %p23
      %p30 = scmp.eq.s32.totalorder %s14, 1
      %p31 = por %p29, %p30
      %p32 = scmp.ne.s32.totalorder %s24, %s27
      %p33 = scmp.eq.s32.totalorder %s14, 0
      %p34 = por %p32, %p33
      %p35 = scmp.ne.s32.totalorder %s24, %s27
      %p36 = scmp.eq.s32.totalorder %s19, 1
      %p37 = por %p35, %p36
      %p38 = scmp.ne.s32.totalorder %s27, %s28
      %p39 = scmp.eq.s32.totalorder %s19, 0
      %p40 = por %p38, %p39
      %p41 = scmp.ne.s32.totalorder %s27, %s28
      %p42 = scmp.eq.s32.totalorder %s20, 1
      %p43 = por %p41, %p42
      %p45 = scmp.ne.s32.totalorder %s28, %s44
      %p46 = scmp.eq.s32.totalorder %s20, 0
      %p47 = por %p45, %p46
      %s48 = ssub.s32 %s14, %s21
      %p49 = scmp.eq.s32.totalorder %s48, 0
      %s51 = sadd.s32 %s50, 1
      %s52 = scalar_select %p49, %s50, %s51
      %p55 = pneg %p49
      %p56 = scmp.eq.s32.totalorder %s14, 1
      %p57 = por %p55, %p56
      %p58 = scmp.ne.s32.totalorder %s50, %s53
      %p59 = scmp.eq.s32.totalorder %s14, 0
      %p60 = por %p58, %p59
      %p61 = scmp.ne.s32.totalorder %s50, %s53
      %p62 = scmp.eq.s32.totalorder %s19, 1
      %p63 = por %p61, %p62
      %p64 = scmp.ne.s32.totalorder %s53, %s54
      %p65 = scmp.eq.s32.totalorder %s19, 0
      %p66 = por %p64, %p65
      %p67 = scmp.ne.s32.totalorder %s53, %s54
      %p68 = scmp.eq.s32.totalorder %s20, 1
      %p69 = por %p67, %p68
      %p71 = scmp.ne.s32.totalorder %s54, %s70
      %p72 = scmp.eq.s32.totalorder %s20, 0
      %p73 = por %p71, %p72
      %s75 = sadd.s32 %s74, 1
      %p78 = scmp.eq.s32.totalorder %s14, 1
      %p79 = scmp.ne.s32.totalorder %s74, %s76
      %p80 = scmp.eq.s32.totalorder %s14, 0
      %p81 = por %p79, %p80
      %p82 = scmp.ne.s32.totalorder %s74, %s76
      %p83 = scmp.eq.s32.totalorder %s19, 1
      %p84 = por %p82, %p83
      %p85 = scmp.ne.s32.totalorder %s76, %s77
      %p86 = scmp.eq.s32.totalorder %s19, 0
      %p87 = por %p85, %p86
      %p88 = scmp.ne.s32.totalorder %s76, %s77
      %p89 = scmp.eq.s32.totalorder %s20, 1
      %p90 = por %p88, %p89
      %p92 = scmp.ne.s32.totalorder %s77, %s91
      %p93 = scmp.eq.s32.totalorder %s20, 0
      %p94 = por %p92, %p93
      %s96 = sadd.s32 %s95, 1
      %p99 = scmp.eq.s32.totalorder %s14, 1
      %p100 = scmp.ne.s32.totalorder %s95, %s97
      %p101 = scmp.eq.s32.totalorder %s14, 0
      %p102 = por %p100, %p101
      %p103 = scmp.ne.s32.totalorder %s95, %s97
      %p104 = scmp.eq.s32.totalorder %s19, 1
      %p105 = por %p103, %p104
      %p106 = scmp.ne.s32.totalorder %s97, %s98
      %p107 = scmp.eq.s32.totalorder %s19, 0
      %p108 = por %p106, %p107
      %p109 = scmp.ne.s32.totalorder %s97, %s98
      %p110 = scmp.eq.s32.totalorder %s20, 1
      %p111 = por %p109, %p110
      %p113 = scmp.ne.s32.totalorder %s98, %s112
      %p114 = scmp.eq.s32.totalorder %s20, 0
      %p115 = por %p113, %p114
      %s116 = ssub.s32 %s14, %s21
      %p117 = scmp.eq.s32.totalorder %s116, 0
      %s119 = sadd.s32 %s118, 1
      %s120 = scalar_select %p117, %s118, %s119
      %p123 = pneg %p117
      %p124 = scmp.eq.s32.totalorder %s14, 1
      %p125 = por %p123, %p124
      %p126 = scmp.ne.s32.totalorder %s118, %s121
      %p127 = scmp.eq.s32.totalorder %s14, 0
      %p128 = por %p126, %p127
      %p129 = scmp.ne.s32.totalorder %s118, %s121
      %p130 = scmp.eq.s32.totalorder %s19, 1
      %p131 = por %p129, %p130
      %p132 = scmp.ne.s32.totalorder %s121, %s122
      %p133 = scmp.eq.s32.totalorder %s19, 0
      %p134 = por %p132, %p133
      %p135 = scmp.ne.s32.totalorder %s121, %s122
      %p136 = scmp.eq.s32.totalorder %s20, 1
      %p137 = por %p135, %p136
      %p139 = scmp.ne.s32.totalorder %s122, %s138
      %p140 = scmp.eq.s32.totalorder %s20, 0
      %p141 = por %p139, %p140
      %p142 = scmp.le.s32.totalorder 1, %s14
      %p143 = scmp.lt.s32.totalorder %s14, 3
      %p144 = pnand %p142, %p143
      %p145 = pneg %p144
      // Predicated region
      $region9: #{tpu_custom_call.1} parent=5 // pred_check
        _
      $region10: #{tpu_custom_call.1} parent=5 // pred_check_branch
        %147 = sbr.rel (%p144) target = $region12
      $region11: #{tpu_custom_call.1} parent=5 // pred_region
        %s148 = ssub.s32 %s14, 1
        // Predicated region
        $region13: #{tpu_custom_call.1} parent=11 // pred_check
          %p149 = pneg %p87
        $region14: #{tpu_custom_call.1} parent=11 // pred_check_branch
          %151 = sbr.rel (%p149) target = $region16
        $region15: #{tpu_custom_call.1} parent=11 // pred_region
          _
        $region16: #{tpu_custom_call.1} parent=11 // pred_fallthru
          _
        // Predicated region
        $region17: #{tpu_custom_call.1} parent=11 // pred_check
          %p152 = pneg %p108
        $region18: #{tpu_custom_call.1} parent=11 // pred_check_branch
          %154 = sbr.rel (%p152) target = $region20
        $region19: #{tpu_custom_call.1} parent=11 // pred_region
          %s156 = ssub.s32 1536, 1536
          %157 = vsyncadd [#allocation3], %s156
          %s158 = sshll.u32 [#allocation2], 4
          %s159 = int_to_ptr.vmem [resolvable:$true] %s158
          %164 = dma.hbm_to_vmem [thread:$0]  %s3, 1536, %s159, [#allocation3], 128, 128, 8
        $region20: #{tpu_custom_call.1} parent=11 // pred_fallthru
          _
      $region12: #{tpu_custom_call.1} parent=5 // pred_fallthru
        _
      %p165 = scmp.lt.s32.totalorder %s14, 2
      // Predicated region
      $region21: #{tpu_custom_call.1} parent=5 // pred_check
        %p166 = pneg %p165
      $region22: #{tpu_custom_call.1} parent=5 // pred_check_branch
        %168 = sbr.rel (%p166) target = $region24
      $region23: #{tpu_custom_call.1} parent=5 // pred_region
        // Predicated region
        $region25: #{tpu_custom_call.1} parent=23 // pred_check
          %p169 = pneg %p34
        $region26: #{tpu_custom_call.1} parent=23 // pred_check_branch
          %171 = sbr.rel (%p169) target = $region28
        $region27: #{tpu_custom_call.1} parent=23 // pred_region
          %s172 = smul.u32 2, %s14
          %p173 = scmp.lt.s32.totalorder %s172, 3
          %s174 = scalar_select %p173, %s172, 3
          %s175 = smul.addr %s174, 8
          %s176 = scalar_lea.vmem %s0, %s175
          %s177 = smul.u32 2, %s14
        $region28: #{tpu_custom_call.1} parent=23 // pred_fallthru
          _
        // Predicated region
        $region29: #{tpu_custom_call.1} parent=23 // pred_check
          %p178 = pneg %p60
        $region30: #{tpu_custom_call.1} parent=23 // pred_check_branch
          %180 = sbr.rel (%p178) target = $region32
        $region31: #{tpu_custom_call.1} parent=23 // pred_region
          %s181 = smul.u32 2, %s14
          %p182 = scmp.lt.s32.totalorder %s181, 3
          %s183 = scalar_select %p182, %s181, 3
          %s184 = smul.addr %s183, 8
          %s185 = scalar_lea.vmem %s1, %s184
          %s186 = smul.u32 2, %s14
        $region32: #{tpu_custom_call.1} parent=23 // pred_fallthru
          _
      $region24: #{tpu_custom_call.1} parent=5 // pred_fallthru
        _
      %p187 = scmp.le.s32.totalorder 1, %s14
      %p188 = scmp.lt.s32.totalorder %s14, 3
      %p189 = pnand %p187, %p188
      %p190 = pneg %p189
      // Predicated region
      $region33: #{tpu_custom_call.1} parent=5 // pred_check
        _
      $region34: #{tpu_custom_call.1} parent=5 // pred_check_branch
        %192 = sbr.rel (%p189) target = $region36
      $region35: #{tpu_custom_call.1} parent=5 // pred_region
        %s193 = ssub.s32 %s14, 1
        // Predicated region
        $region37: #{tpu_custom_call.1} parent=35 // pred_check
          %p194 = pneg %p108
        $region38: #{tpu_custom_call.1} parent=35 // pred_check_branch
          %196 = sbr.rel (%p194) target = $region40
        $region39: #{tpu_custom_call.1} parent=35 // pred_region
          %197 = dma.done [#allocation3], 1536
        $region40: #{tpu_custom_call.1} parent=35 // pred_fallthru
          _
        %s198 = smul.u32 2, %s19
        %p199 = scmp.lt.s32.totalorder %s198, 3
        %s200 = scalar_select %p199, %s198, 3
        %s201 = smul.addr %s200, 8
        %s202 = scalar_lea.vmem %s0, %s201
        %p203 = pneg %p40
        %p204 = pneg %p37
        %s205 = smul.u32 2, %s19
        %p206 = scmp.lt.s32.totalorder %s205, 3
        %s207 = scalar_select %p206, %s205, 3
        %s208 = smul.addr %s207, 8
        %s209 = scalar_lea.vmem %s1, %s208
        %p210 = pneg %p66
        %p211 = pneg %p63
        %p212 = pneg %p87
        %p213 = pneg %p84
        %p214 = pneg %p108
        %p215 = pneg %p105
        %p216 = pneg %p134
        %p217 = pneg %p131
        %s218 = sand.u32 %s121, 1
        %s219 = scalar_lea.sflag [#allocation4], %s218
        %s220 = sand.u32 %s121, 1
        %s221 = smul.addr %s220, 16
        %s222 = scalar_lea.vmem [#allocation5], %s221
        %s223 = smul.u32 2, %s19
        %p224 = scmp.lt.s32.totalorder %s223, 3
        %s225 = scalar_select %p224, %s223, 3
        %s226 = smul.addr %s225, 8
        %s227 = scalar_lea.vmem %s0, %s226
        %s228 = smul.u32 2, %s19
        %s229 = smul.u32 2, %s19
        %p230 = scmp.lt.s32.totalorder %s229, 3
        %s231 = scalar_select %p230, %s229, 3
        %s232 = smul.addr %s231, 8
        %s233 = scalar_lea.vmem %s1, %s232
        %s234 = smul.u32 2, %s19
        %s235 = smul.u32 2, %s19
        %v236 = vld [vmem:[%s227] sm:$0xff]
        %v237 = vld [vmem:[%s227 + $0x8] sm:$0xff]
        %v238 = vld [vmem:[%s233] sm:$0xff]
        %v239 = vld [vmem:[%s233 + $0x8] sm:$0xff]
        %v240 = vlaneseq
        %v241 = vand.u32 %v240, 127
        %242 = vset.pattern.permute.xlu0 0
        %243 = vperm.xlu0 %242, %v236
        %v244 = vpop.permute.xlu0 %243
        %245 = vset.pattern.permute.xlu0 0
        %246 = vperm.xlu0 %245, %v237
        %v247 = vpop.permute.xlu0 %246
        %vm248 = vcmp.eq.s32.totalorder %v244, %v241
        %vm249 = vcmp.eq.s32.totalorder %v247, %v241
        %v250 = vsel %vm248, 1, 0
        %v251 = vsel %vm249, 1, 0
        %v252 = vcvt.s32.f32 %v250
        %v253 = vcvt.s32.f32 %v251
        %254 = vset.pattern.permute.xlu0 0
        %255 = vperm.xlu0 %254, %v238
        %v256 = vpop.permute.xlu0 %255
        %257 = vset.pattern.permute.xlu0 0
        %258 = vperm.xlu0 %257, %v239
        %v259 = vpop.permute.xlu0 %258
        %vm260 = vcmp.eq.s32.totalorder %v256, %v241
        %vm261 = vcmp.eq.s32.totalorder %v259, %v241
        %v262 = vsel %vm260, 1, 0
        %v263 = vsel %vm261, 1, 0
        %v264 = vcvt.s32.f32 %v262
        %v265 = vcvt.s32.f32 %v263
        %v266 = vld [vmem:[%s2] sm:$0xff]
        %v267 = vld [vmem:[%s2 + $0x8] sm:$0xff]
        %v268 = vld [vmem:[%s2 + $0x10] sm:$0xff]
        %v269 = vld [vmem:[%s2 + $0x18] sm:$0xff]
        %v270 = vld [vmem:[%s2 + $0x20] sm:$0xff]
        %v271 = vld [vmem:[%s2 + $0x28] sm:$0xff]
        %v272 = vld [vmem:[%s2 + $0x30] sm:$0xff]
        %v273 = vld [vmem:[%s2 + $0x38] sm:$0xff]
        %vm274 = vcmask 523264
        %v276 = vsel %vm274, %v252, 0
        %v279 = vsel %vm274, %v253, 0
        %281 = vmatprep.subr.mxu0 0.0
        %282 = vmatpush1.msra.mxu0 0.0
        %283 = vmatprep.subr.mxu0 0.0
        %284 = vmatpush1.msra.mxu0 0.0
        %285 = vmatprep.subr.mxu0 0.0
        %286 = vmatpush1.msra.mxu0 0.0
        %287 = vmatprep.subr.mxu0 0.0
        %288 = vmatpush1.msra.mxu0 0.0
        %289 = vmatprep.subr.mxu0 0.0
        %290 = vmatpush1.msra.mxu0 0.0
        %291 = vmatprep.subr.mxu0 0.0
        %292 = vmatpush1.msra.mxu0 0.0
        %293 = vmatprep.subr.mxu0 0.0
        %294 = vmatpush1.msra.mxu0 0.0
        %295 = vmatprep.subr.mxu0 0.0
        %296 = vmatpush1.msra.mxu0 0.0
        %297 = vmatprep.subr.mxu0 0.0
        %298 = vmatpush1.msra.mxu0 %v273
        %299 = vmatprep.subr.mxu0 0.0
        %300 = vmatpush1.msra.mxu0 %v272
        %301 = vmatprep.subr.mxu0 0.0
        %302 = vmatpush1.msra.mxu0 %v271
        %303 = vmatprep.subr.mxu0 0.0
        %304 = vmatpush1.msra.mxu0 %v270
        %305 = vmatprep.subr.mxu0 0.0
        %306 = vmatpush1.msra.mxu0 %v269
        %307 = vmatprep.subr.mxu0 0.0
        %308 = vmatpush1.msra.mxu0 %v268
        %309 = vmatprep.subr.mxu0 0.0
        %310 = vmatpush1.msra.mxu0 %v267
        %311 = vmatprep.subr.mxu0 0.0
        %312 = vmatpush1.msra.mxu0 %v266
        %313 = vmatprep.subr.mxu0 0.0
        %314 = vmatpush2.msra.mxu0 0.0
        %315 = vmatprep.subr.mxu0 0.0
        %316 = vmatpush2.msra.mxu0 0.0
        %317 = vmatprep.subr.mxu0 0.0
        %318 = vmatpush2.msra.mxu0 0.0
        %319 = vmatprep.subr.mxu0 0.0
        %320 = vmatpush2.msra.mxu0 0.0
        %321 = vmatprep.subr.mxu0 0.0
        %322 = vmatpush2.msra.mxu0 0.0
        %323 = vmatprep.subr.mxu0 0.0
        %324 = vmatpush2.msra.mxu0 0.0
        %325 = vmatprep.subr.mxu0 0.0
        %326 = vmatpush2.msra.mxu0 0.0
        %327 = vmatprep.subr.mxu0 0.0
        %328 = vmatpush2.msra.mxu0 0.0
        %329 = vmatprep.subr.mxu0 0.0
        %330 = vmatpush2.msra.mxu0 0.0
        %331 = vmatprep.subr.mxu0 0.0
        %332 = vmatpush2.msra.mxu0 0.0
        %333 = vmatprep.subr.mxu0 0.0
        %334 = vmatpush2.msra.mxu0 0.0
        %335 = vmatprep.subr.mxu0 0.0
        %336 = vmatpush2.msra.mxu0 0.0
        %337 = vmatprep.subr.mxu0 0.0
        %338 = vmatpush2.msra.mxu0 0.0
        %339 = vmatprep.subr.mxu0 0.0
        %340 = vmatpush2.msra.mxu0 0.0
        %341 = vmatprep.subr.mxu0 0.0
        %342 = vmatpush2.msra.mxu0 0.0
        %343 = vmatprep.subr.mxu0 0.0
        %344 = vmatpush2.msra.mxu0 0.0
        %345 = vmatprep.mubr.f32.mxu0 0.0
        %346 = vmatmul.mubr.f32.gmra.mxu0 %v276
        %v347 = vpop.f32.mrf.mxu0
        %v348 = vadd.f32 0.0, %v347
        %v349 = vpop.f32.mrf.mxu0
        %350 = vmatprep.mubr.f32.mxu0 0.0
        %351 = vmatmul.mubr.f32.gmra.mxu0 %v279
        %v352 = vpop.f32.mrf.mxu0
        %v353 = vadd.f32 0.0, %v352
        %v354 = vpop.f32.mrf.mxu0
        %355 = vdwg.mxu0
        %v356 = vld [vmem:[#allocation2] sm:$0xff]
        %v357 = vld [vmem:[#allocation2 + $0x8] sm:$0xff]
        %v358 = vld [vmem:[#allocation2 + $0x10] sm:$0xff]
        %v359 = vld [vmem:[#allocation2 + $0x18] sm:$0xff]
        %v360 = vld [vmem:[#allocation2 + $0x20] sm:$0xff]
        %v361 = vld [vmem:[#allocation2 + $0x28] sm:$0xff]
        %v362 = vld [vmem:[#allocation2 + $0x30] sm:$0xff]
        %v363 = vld [vmem:[#allocation2 + $0x38] sm:$0xff]
        %v364 = vld [vmem:[#allocation2 + $0x40] sm:$0xff]
        %v365 = vld [vmem:[#allocation2 + $0x48] sm:$0xff]
        %v366 = vld [vmem:[#allocation2 + $0x50] sm:$0xff]
        %v367 = vld [vmem:[#allocation2 + $0x58] sm:$0xff]
        %vm368 = vcmask 785408
        %v370 = vsel %vm368, %v264, 0
        %v373 = vsel %vm368, %v265, 0
        %375 = vmatprep.subr.mxu0 0.0
        %376 = vmatpush1.msra.mxu0 0.0
        %377 = vmatprep.subr.mxu0 0.0
        %378 = vmatpush1.msra.mxu0 0.0
        %379 = vmatprep.subr.mxu0 0.0
        %380 = vmatpush1.msra.mxu0 0.0
        %381 = vmatprep.subr.mxu0 0.0
        %382 = vmatpush1.msra.mxu0 0.0
        %383 = vmatprep.subr.mxu0 0.0
        %384 = vmatpush1.msra.mxu0 %v367
        %385 = vmatprep.subr.mxu0 0.0
        %386 = vmatpush1.msra.mxu0 %v366
        %387 = vmatprep.subr.mxu0 0.0
        %388 = vmatpush1.msra.mxu0 %v365
        %389 = vmatprep.subr.mxu0 0.0
        %390 = vmatpush1.msra.mxu0 %v364
        %391 = vmatprep.subr.mxu0 0.0
        %392 = vmatpush1.msra.mxu0 %v363
        %393 = vmatprep.subr.mxu0 0.0
        %394 = vmatpush1.msra.mxu0 %v362
        %395 = vmatprep.subr.mxu0 0.0
        %396 = vmatpush1.msra.mxu0 %v361
        %397 = vmatprep.subr.mxu0 0.0
        %398 = vmatpush1.msra.mxu0 %v360
        %399 = vmatprep.subr.mxu0 0.0
        %400 = vmatpush1.msra.mxu0 %v359
        %401 = vmatprep.subr.mxu0 0.0
        %402 = vmatpush1.msra.mxu0 %v358
        %403 = vmatprep.subr.mxu0 0.0
        %404 = vmatpush1.msra.mxu0 %v357
        %405 = vmatprep.subr.mxu0 0.0
        %406 = vmatpush1.msra.mxu0 %v356
        %407 = vmatprep.subr.mxu0 0.0
        %408 = vmatpush2.msra.mxu0 0.0
        %409 = vmatprep.subr.mxu0 0.0
        %410 = vmatpush2.msra.mxu0 0.0
        %411 = vmatprep.subr.mxu0 0.0
        %412 = vmatpush2.msra.mxu0 0.0
        %413 = vmatprep.subr.mxu0 0.0
        %414 = vmatpush2.msra.mxu0 0.0
        %415 = vmatprep.subr.mxu0 0.0
        %416 = vmatpush2.msra.mxu0 0.0
        %417 = vmatprep.subr.mxu0 0.0
        %418 = vmatpush2.msra.mxu0 0.0
        %419 = vmatprep.subr.mxu0 0.0
        %420 = vmatpush2.msra.mxu0 0.0
        %421 = vmatprep.subr.mxu0 0.0
        %422 = vmatpush2.msra.mxu0 0.0
        %423 = vmatprep.subr.mxu0 0.0
        %424 = vmatpush2.msra.mxu0 0.0
        %425 = vmatprep.subr.mxu0 0.0
        %426 = vmatpush2.msra.mxu0 0.0
        %427 = vmatprep.subr.mxu0 0.0
        %428 = vmatpush2.msra.mxu0 0.0
        %429 = vmatprep.subr.mxu0 0.0
        %430 = vmatpush2.msra.mxu0 0.0
        %431 = vmatprep.subr.mxu0 0.0
        %432 = vmatpush2.msra.mxu0 0.0
        %433 = vmatprep.subr.mxu0 0.0
        %434 = vmatpush2.msra.mxu0 0.0
        %435 = vmatprep.subr.mxu0 0.0
        %436 = vmatpush2.msra.mxu0 0.0
        %437 = vmatprep.subr.mxu0 0.0
        %438 = vmatpush2.msra.mxu0 0.0
        %439 = vmatprep.mubr.f32.mxu0 0.0
        %440 = vmatmul.mubr.f32.gmra.mxu0 %v370
        %v441 = vpop.f32.mrf.mxu0
        %v442 = vadd.f32 0.0, %v441
        %v443 = vpop.f32.mrf.mxu0
        %444 = vmatprep.mubr.f32.mxu0 0.0
        %445 = vmatmul.mubr.f32.gmra.mxu0 %v373
        %v446 = vpop.f32.mrf.mxu0
        %v447 = vadd.f32 0.0, %v446
        %v448 = vpop.f32.mrf.mxu0
        %449 = vdwg.mxu0
        %v450 = vmul.f32 %v348, %v442
        %v451 = vmul.f32 %v353, %v447
        %452 = vst [vmem:[%s222] sm:$0xff] %v450
        %453 = vst [vmem:[%s222 + $0x8] sm:$0xff] %v451
        %s454 = sand.u32 %s121, 1
        %s455 = scalar_lea.sflag [#allocation4], %s454
        %s456 = sand.u32 %s121, 1
        %s457 = smul.addr %s456, 16
        %s458 = scalar_lea.vmem [#allocation5], %s457
        // Predicated region
        $region41: #{tpu_custom_call.1} parent=35 // pred_check
          %p459 = pneg %p131
        $region42: #{tpu_custom_call.1} parent=35 // pred_check_branch
          %461 = sbr.rel (%p459) target = $region44
        $region43: #{tpu_custom_call.1} parent=35 // pred_region
          %s462 = smul.u32 2, %s19
          %s464 = ssub.s32 256, 256
          %465 = vsyncadd %s455, %s464
          %s466 = smul.addr %s462, 128
          %s467 = scalar_lea.hbm %s4, %s466
          %s468 = sshll.u32 %s458, 4
          %s469 = int_to_ptr.vmem [resolvable:$true] %s468
          %474 = dma.vmem_to_hbm [thread:$0]  %s469, 256, %s467, %s455, 128, 128, 8
        $region44: #{tpu_custom_call.1} parent=35 // pred_fallthru
          _
      $region36: #{tpu_custom_call.1} parent=5 // pred_fallthru
        _
      %p475 = scmp.le.s32.totalorder 2, %s14
      // Predicated region
      $region45: #{tpu_custom_call.1} parent=5 // pred_check
        %p476 = pneg %p475
      $region46: #{tpu_custom_call.1} parent=5 // pred_check_branch
        %478 = sbr.rel (%p476) target = $region48
      $region47: #{tpu_custom_call.1} parent=5 // pred_region
        %s479 = ssub.s32 %s14, 2
        // Predicated region
        $region49: #{tpu_custom_call.1} parent=47 // pred_check
          %p480 = pneg %p137
        $region50: #{tpu_custom_call.1} parent=47 // pred_check_branch
          %482 = sbr.rel (%p480) target = $region52
        $region51: #{tpu_custom_call.1} parent=47 // pred_region
          %s483 = sand.u32 %s122, 1
          %s484 = scalar_lea.sflag [#allocation4], %s483
          %s485 = sand.u32 %s122, 1
          %s486 = smul.addr %s485, 16
          %s487 = scalar_lea.vmem [#allocation5], %s486
          %488 = dma.done %s484, 256
        $region52: #{tpu_custom_call.1} parent=47 // pred_fallthru
          _
      $region48: #{tpu_custom_call.1} parent=5 // pred_fallthru
        _
    $region6: #{tpu_custom_call.1} parent=1 // loop_footer
      %s18 = sadd.s32 1, %s14
    $region7: #{tpu_custom_call.1} parent=1 // loop_footer_branch
      %13 = sbr.rel target = $region3
    $region8: #{tpu_custom_call.1} parent=1 // loop_exit
      _
    %489 = vsyncpa [#allocation3], 1
    %s490 = scalar_lea.sflag [#allocation3], 1
    %491 = vsyncpa %s490, 1
    %492 = vsyncpa [#allocation4], 1
    %s493 = scalar_lea.sflag [#allocation4], 1
    %494 = vsyncpa %s493, 1

</llo_original>
